<compile_context>
chip_gen: v7x
topology: tpu7x:2x2x1
jax: 0.10.0
libtpu: 0.0.40
codegen_flags: <defaults>
</compile_context>

<pallas_src>
import functools

import jax
import jax.numpy as jnp
from jax.experimental import pallas as pl
from jax.experimental.pallas import tpu as pltpu

LANE = 128


def _round_up(v, m):
    return (v + m - 1) // m * m


def _pad2(a, rows, cols):
    return jnp.pad(a, ((0, rows - a.shape[0]), (0, cols - a.shape[1])))


def _vmem_budget_bytes():
    """~3/4 of physical VMEM (v7x: 64 MiB -> 48, v5e/v6e: 128 -> 96), capped at
    112 MiB.  Conservative 48 MiB fallback (safe on every generation)."""
    try:
        cap = pltpu.get_tpu_info().vmem_capacity_bytes
    except Exception:
        cap = 64 * 1024 * 1024
    return min(int(cap) * 3 // 4, 112 * 1024 * 1024)


def _vmem_estimate(Np, F, H, O, tile_m, tile_k):
    """Conservative per-layer VMEM footprint (assumes 2x buffering everywhere)."""
    h_resident = 2 * Np * F * 2                        # resident bf16 node features
    a_tiles = 2 * tile_m * tile_k * 2                  # double-buffered bf16 A tiles
    out_tiles = 2 * tile_m * O * 4                     # double-buffered output (worst f32)
    weights = 2 * ((F * H + H * O) * 2 + (H + O) * 4)  # bf16 weights + f32 biases
    acc = tile_m * F * 4                               # f32 aggregation accumulator
    return h_resident + a_tiles + out_tiles + weights + acc


def _choose_tiles(Np, F, H, O, budget):
    """Largest (tile_m, tile_k) divisors of Np that fit the VMEM budget."""
    cands = [t for t in (1024, 512, 256, 128) if Np % t == 0]
    # Prefer >=2 row tiles so the "parallel" grid axis can split across the
    # two TensorCores on v7x-class chips.
    tm_cands = [t for t in cands if Np // t >= 2] or cands
    for tm in tm_cands:
        for tk in cands:
            if _vmem_estimate(Np, F, H, O, tm, tk) <= budget:
                return tm, tk
    return 128, 128


def _gin_layer_kernel(a_ref, h_ref, wa_ref, ba_ref, wb_ref, bb_ref,
                      out_ref, acc_ref, *, relu_out, tile_m, tile_k):
    """One GIN layer for one row-tile of nodes, reducing over col-tiles of A.

    grid = (row_tiles, col_tiles); col axis is the reduction (last, "arbitrary").
    h_ref is the full resident bf16 node-feature matrix: sliced for both the
    aggregation RHS (col tile k) and the residual (row tile i).
    """
    i = pl.program_id(0)
    k = pl.program_id(1)

    @pl.when(k == 0)
    def _():
        acc_ref[...] = jnp.zeros_like(acc_ref)

    # Neighbor sum-aggregation: acc += A[i, k] @ h[k]   (bf16 MXU, f32 acc).
    kk = pl.multiple_of(k * tile_k, tile_k)
    acc_ref[...] += jnp.dot(a_ref[...], h_ref[pl.ds(kk, tile_k), :],
                            preferred_element_type=jnp.float32)

    @pl.when(k == pl.num_programs(1) - 1)
    def _():
        ii = pl.multiple_of(i * tile_m, tile_m)
        # (1 + eps) * x_i + sum_{j in N(i)} x_j   with eps = 0
        h = acc_ref[...] + h_ref[pl.ds(ii, tile_m), :].astype(jnp.float32)
        # MLP: Linear -> ReLU -> Linear  (bf16 weights, f32 accumulate, f32 bias)
        h = jnp.dot(h.astype(wa_ref.dtype), wa_ref[...],
                    preferred_element_type=jnp.float32) + ba_ref[...]
        h = jnp.maximum(h, 0.0)
        h = jnp.dot(h.astype(wb_ref.dtype), wb_ref[...],
                    preferred_element_type=jnp.float32) + bb_ref[...]
        if relu_out:
            h = jnp.maximum(h, 0.0)
        out_ref[...] = h.astype(out_ref.dtype)


def _gin_layer(A, h, wa, ba, wb, bb, *, relu_out, out_dtype, tile_m, tile_k,
               vmem_limit_bytes):
    """out = MLP(h + A @ h) for all nodes. A:[Np,Np] bf16, h:[Np,F] bf16."""
    Np = A.shape[0]
    F = h.shape[1]
    H = wa.shape[1]
    O = wb.shape[1]
    grid = (Np // tile_m, Np // tile_k)

    flops = 2 * Np * Np * F + 2 * Np * F * H + 2 * Np * H * O
    bytes_accessed = int(A.size * A.dtype.itemsize                 # A tiles (read once)
                         + h.size * h.dtype.itemsize               # resident h (read once)
                         + (wa.size + wb.size) * 2
                         + (ba.size + bb.size) * 4
                         + Np * O * jnp.dtype(out_dtype).itemsize)  # output

    kernel = functools.partial(_gin_layer_kernel, relu_out=relu_out,
                               tile_m=tile_m, tile_k=tile_k)

    return pl.pallas_call(
        kernel,
        out_shape=jax.ShapeDtypeStruct((Np, O), out_dtype),
        grid_spec=pltpu.PrefetchScalarGridSpec(
            num_scalar_prefetch=0,
            grid=grid,
            in_specs=[
                pl.BlockSpec((tile_m, tile_k), lambda i, k: (i, k)),  # A tile (bf16)
                pl.BlockSpec((Np, F), lambda i, k: (0, 0)),           # resident h (bf16)
                pl.BlockSpec((F, H), lambda i, k: (0, 0)),            # W_a (bf16, resident)
                pl.BlockSpec((1, H), lambda i, k: (0, 0)),            # b_a (f32)
                pl.BlockSpec((H, O), lambda i, k: (0, 0)),            # W_b (bf16, resident)
                pl.BlockSpec((1, O), lambda i, k: (0, 0)),            # b_b (f32)
            ],
            out_specs=pl.BlockSpec((tile_m, O), lambda i, k: (i, 0)),
            scratch_shapes=[pltpu.VMEM((tile_m, F), jnp.float32)],    # aggregation acc
        ),
        compiler_params=pltpu.CompilerParams(
            dimension_semantics=("parallel", "arbitrary"),
            vmem_limit_bytes=vmem_limit_bytes),
        cost_estimate=pl.CostEstimate(flops=flops, transcendentals=0,
                                      bytes_accessed=bytes_accessed),
    )(A, h, wa, ba, wb, bb)


def gin_forward(x, edge_index, params):
    """x: [N, Din] float32, edge_index: [2, E] int32."""
    N, din = x.shape
    (w1a, b1a, w1b, b1b, w2a, b2a, w2b, b2b, wfc, bfc) = params
    H = w1a.shape[1]
    out_dim = wfc.shape[1]

    # Pad node count to the smallest workable multiple (A is O(Np^2), so
    # padding waste matters); pad feature dims to 128 lanes (lane-dense vst).
    Np = _round_up(N, 128) if N <= 128 else _round_up(N, 256)
    Fp = _round_up(din, LANE)
    Hp = _round_up(H, LANE)
    Op = _round_up(out_dim, LANE)

    budget = _vmem_budget_bytes()
    tile_m, tile_k = _choose_tiles(Np, max(Fp, Hp), Hp, max(Hp, Op), budget)

    # Dense adjacency scattered directly in bf16: A[dst, src] += 1
    # (messages flow src -> dst, sum aggregation).  Exact while per-(dst,src)
    # edge multiplicity <= 256; no f32 build + cast round-trip through HBM.
    A = jnp.zeros((Np, Np), jnp.bfloat16).at[edge_index[1], edge_index[0]].add(1.0)

    # One bf16 copy of the node features feeds both the aggregation RHS and
    # the residual (all f32 math stays inside the kernel's accumulator).
    x_bf16 = _pad2(x, Np, Fp).astype(jnp.bfloat16)

    # Weights in bf16 (MXU native), biases in f32 (added to the f32 acc).
    w1a_p, b1a_p = _pad2(w1a, Fp, Hp).astype(jnp.bfloat16), _pad2(b1a, 1, Hp)
    w1b_p, b1b_p = _pad2(w1b, Hp, Hp).astype(jnp.bfloat16), _pad2(b1b, 1, Hp)
    w2a_p, b2a_p = _pad2(w2a, Hp, Hp).astype(jnp.bfloat16), _pad2(b2a, 1, Hp)
    # Fuse the second MLP's output linear with the final fc (exact: no
    # nonlinearity between them): (h @ w2b + b2b) @ wfc + bfc
    #                          == h @ (w2b @ wfc) + (b2b @ wfc + bfc)
    wf = w2b @ wfc
    bf = b2b @ wfc + bfc
    wf_p, bf_p = _pad2(wf, Hp, Op).astype(jnp.bfloat16), _pad2(bf, 1, Op)

    # conv1 -> outer ReLU; h1 emitted in bf16 (it only feeds layer 2's
    # aggregation + residual).  Dropout(p=0.5) is identity in eval mode.
    h1 = _gin_layer(A, x_bf16, w1a_p, b1a_p, w1b_p, b1b_p,
                    relu_out=True, out_dtype=jnp.bfloat16,
                    tile_m=tile_m, tile_k=tile_k, vmem_limit_bytes=budget)
    # conv2 -> fused fc; final output in f32.
    out = _gin_layer(A, h1, w2a_p, b2a_p, wf_p, bf_p,
                     relu_out=False, out_dtype=jnp.float32,
                     tile_m=tile_m, tile_k=tile_k, vmem_limit_bytes=budget)

    return out[:N, :out_dim]


def init_params(key, input_dim, hidden_dim, output_dim):
    ks = jax.random.split(key, 10)

    def lin(kw, fan_in, fan_out):
        w = jax.random.normal(kw, (fan_in, fan_out), jnp.float32) * 0.1
        b = jnp.zeros((1, fan_out), jnp.float32)
        return w, b

    w1a, b1a = lin(ks[0], input_dim, hidden_dim)
    w1b, b1b = lin(ks[1], hidden_dim, hidden_dim)
    w2a, b2a = lin(ks[2], hidden_dim, hidden_dim)
    w2b, b2b = lin(ks[3], hidden_dim, hidden_dim)
    wfc, bfc = lin(ks[4], hidden_dim, output_dim)
    return (w1a, b1a, w1b, b1b, w2a, b2a, w2b, b2b, wfc, bfc)


def gin_reference(x, edge_index, params):
    """Pure-JAX f32 reference for sanity checking."""
    N = x.shape[0]
    A = jnp.zeros((N, N), jnp.float32).at[edge_index[1], edge_index[0]].add(1.0)
    (w1a, b1a, w1b, b1b, w2a, b2a, w2b, b2b, wfc, bfc) = params
    h = x + A @ x
    h = jnp.maximum(h @ w1a + b1a, 0.0)
    h = h @ w1b + b1b
    h = jnp.maximum(h, 0.0)
    h2 = h + A @ h
    h2 = jnp.maximum(h2 @ w2a + b2a, 0.0)
    h2 = h2 @ w2b + b2b
    return h2 @ wfc + bfc


if __name__ == "__main__":
    key = jax.random.PRNGKey(0)
    k_x, k_e, k_p = jax.random.split(key, 3)

    N = 8            # number of graph nodes
    E = 16           # number of directed edges
    input_dim = 4
    hidden_dim = 32
    output_dim = 8

    x = jax.random.normal(k_x, (N, input_dim), jnp.float32)
    edge_index = jax.random.randint(k_e, (2, E), 0, N, dtype=jnp.int32)
    params = init_params(k_p, input_dim, hidden_dim, output_dim)

    out = gin_forward(x, edge_index, params)
    out = jax.block_until_ready(out)

    ref = gin_reference(x, edge_index, params)
    assert out.shape == (N, output_dim)
    # Tolerance accounts for bf16 operands throughout the MXU path
    # (A, node features, h1, weights) with f32 accumulation; values O(0.01..3).
    assert jnp.allclose(out, ref, atol=5e-2, rtol=5e-2), "mismatch vs JAX reference"

    print("KERNEL_OK")
</pallas_src>

<mosaic_0001>
module attributes {stable_mosaic.version = 11 : i64} {
  func.func @_gin_layer_kernel(%arg0: i32, %arg1: i32, %arg2: memref<128x128xbf16, #tpu.memory_space<vmem>>, %arg3: memref<128x128xbf16, #tpu.memory_space<vmem>>, %arg4: memref<128x128xbf16, #tpu.memory_space<vmem>>, %arg5: memref<1x128xf32, #tpu.memory_space<vmem>>, %arg6: memref<128x128xbf16, #tpu.memory_space<vmem>>, %arg7: memref<1x128xf32, #tpu.memory_space<vmem>>, %arg8: memref<128x128xbf16, #tpu.memory_space<vmem>>, %arg9: memref<128x128xf32, #tpu.memory_space<vmem>>) attributes {dimension_semantics = [#tpu.dimension_semantics<parallel>, #tpu.dimension_semantics<arbitrary>], iteration_bounds = array<i64: 1, 1>, scalar_prefetch = 0 : i64, scratch_operands = 1 : i64, tpu.core_type = #tpu.core_type<tc>, window_params = [{transform_indices = @transform_0, window_bounds = array<i64: 128, 128>}, {pipeline_mode = #tpu.pipeline_mode<synchronous>, transform_indices = @transform_1, window_bounds = array<i64: 128, 128>}, {pipeline_mode = #tpu.pipeline_mode<synchronous>, transform_indices = @transform_2, window_bounds = array<i64: 128, 128>}, {pipeline_mode = #tpu.pipeline_mode<synchronous>, transform_indices = @transform_3, window_bounds = array<i64: 1, 128>}, {pipeline_mode = #tpu.pipeline_mode<synchronous>, transform_indices = @transform_4, window_bounds = array<i64: 128, 128>}, {pipeline_mode = #tpu.pipeline_mode<synchronous>, transform_indices = @transform_5, window_bounds = array<i64: 1, 128>}, {transform_indices = @transform_6, window_bounds = array<i64: 128, 128>}]} {
    %c0_i32 = arith.constant 0 : i32
    %0 = arith.cmpi eq, %arg1, %c0_i32 : i32
    %1 = arith.extui %0 : i1 to i32
    %c0_i32_0 = arith.constant 0 : i32
    %2 = arith.cmpi ne, %1, %c0_i32_0 : i32
    scf.if %2 {
      %cst_9 = arith.constant 0.000000e+00 : f32
      %15 = vector.broadcast %cst_9 : f32 to vector<128x128xf32>
      %c0_10 = arith.constant 0 : index
      %c0_11 = arith.constant 0 : index
      %16 = vector.load %arg9[%c0_10, %c0_11] : memref<128x128xf32, #tpu.memory_space<vmem>>, vector<128x128xf32>
      tpu.vector_store %arg9[%c0_10, %c0_11], %15 {strides = array<i32>} : memref<128x128xf32, #tpu.memory_space<vmem>>, vector<128x128xf32>,
    } else {
    }
    %c128_i32 = arith.constant 128 : i32
    %3 = arith.muli %arg1, %c128_i32 : i32
    %4 = tpu.assume_multiple %3, 128 : i32
    %c0 = arith.constant 0 : index
    %c0_1 = arith.constant 0 : index
    %5 = vector.load %arg9[%c0, %c0_1] : memref<128x128xf32, #tpu.memory_space<vmem>>, vector<128x128xf32>
    %c0_2 = arith.constant 0 : index
    %c0_3 = arith.constant 0 : index
    %6 = vector.load %arg2[%c0_2, %c0_3] : memref<128x128xbf16, #tpu.memory_space<vmem>>, vector<128x128xbf16>
    %7 = arith.index_cast %4 : i32 to index
    %c0_4 = arith.constant 0 : index
    %8 = vector.load %arg3[%7, %c0_4] : memref<128x128xbf16, #tpu.memory_space<vmem>>, vector<128x128xbf16>
    %cst = arith.constant dense<0.000000e+00> : vector<128x128xf32>
    %9 = tpu.matmul %6, %8, %cst {dimension_numbers = #tpu.dot_dimension_numbers<[1], [0], [0], [1], [0, 0, 1, 1], [], []>} : vector<128x128xbf16>, vector<128x128xbf16>, vector<128x128xf32> -> vector<128x128xf32>
    %10 = arith.addf %5, %9 : vector<128x128xf32>
    %c0_5 = arith.constant 0 : index
    %c0_6 = arith.constant 0 : index
    %11 = vector.load %arg9[%c0_5, %c0_6] : memref<128x128xf32, #tpu.memory_space<vmem>>, vector<128x128xf32>
    tpu.vector_store %arg9[%c0_5, %c0_6], %10 {strides = array<i32>} : memref<128x128xf32, #tpu.memory_space<vmem>>, vector<128x128xf32>,
    %c0_i32_7 = arith.constant 0 : i32
    %12 = arith.cmpi eq, %arg1, %c0_i32_7 : i32
    %13 = arith.extui %12 : i1 to i32
    %c0_i32_8 = arith.constant 0 : i32
    %14 = arith.cmpi ne, %13, %c0_i32_8 : i32
    scf.if %14 {
      %c128_i32_9 = arith.constant 128 : i32
      %15 = arith.muli %arg0, %c128_i32_9 : i32
      %16 = tpu.assume_multiple %15, 128 : i32
      %c0_10 = arith.constant 0 : index
      %c0_11 = arith.constant 0 : index
      %17 = vector.load %arg9[%c0_10, %c0_11] : memref<128x128xf32, #tpu.memory_space<vmem>>, vector<128x128xf32>
      %18 = arith.index_cast %16 : i32 to index
      %c0_12 = arith.constant 0 : index
      %19 = vector.load %arg3[%18, %c0_12] : memref<128x128xbf16, #tpu.memory_space<vmem>>, vector<128x128xbf16>
      %20 = arith.extf %19 : vector<128x128xbf16> to vector<128x128xf32>
      %21 = arith.addf %17, %20 : vector<128x128xf32>
      %22 = arith.truncf %21 : vector<128x128xf32> to vector<128x128xbf16>
      %c0_13 = arith.constant 0 : index
      %c0_14 = arith.constant 0 : index
      %23 = vector.load %arg4[%c0_13, %c0_14] : memref<128x128xbf16, #tpu.memory_space<vmem>>, vector<128x128xbf16>
      %cst_15 = arith.constant dense<0.000000e+00> : vector<128x128xf32>
      %24 = tpu.matmul %22, %23, %cst_15 {dimension_numbers = #tpu.dot_dimension_numbers<[1], [0], [0], [1], [0, 0, 1, 1], [], []>} : vector<128x128xbf16>, vector<128x128xbf16>, vector<128x128xf32> -> vector<128x128xf32>
      %c0_16 = arith.constant 0 : index
      %c0_17 = arith.constant 0 : index
      %25 = vector.load %arg5[%c0_16, %c0_17] : memref<1x128xf32, #tpu.memory_space<vmem>>, vector<1x128xf32>
      %26 = vector.broadcast %25 : vector<1x128xf32> to vector<128x128xf32>
      %27 = arith.addf %24, %26 : vector<128x128xf32>
      %cst_18 = arith.constant 0.000000e+00 : f32
      %28 = vector.broadcast %cst_18 : f32 to vector<128x128xf32>
      %29 = arith.maximumf %27, %28 : vector<128x128xf32>
      %30 = arith.truncf %29 : vector<128x128xf32> to vector<128x128xbf16>
      %c0_19 = arith.constant 0 : index
      %c0_20 = arith.constant 0 : index
      %31 = vector.load %arg6[%c0_19, %c0_20] : memref<128x128xbf16, #tpu.memory_space<vmem>>, vector<128x128xbf16>
      %cst_21 = arith.constant dense<0.000000e+00> : vector<128x128xf32>
      %32 = tpu.matmul %30, %31, %cst_21 {dimension_numbers = #tpu.dot_dimension_numbers<[1], [0], [0], [1], [0, 0, 1, 1], [], []>} : vector<128x128xbf16>, vector<128x128xbf16>, vector<128x128xf32> -> vector<128x128xf32>
      %c0_22 = arith.constant 0 : index
      %c0_23 = arith.constant 0 : index
      %33 = vector.load %arg7[%c0_22, %c0_23] : memref<1x128xf32, #tpu.memory_space<vmem>>, vector<1x128xf32>
      %34 = vector.broadcast %33 : vector<1x128xf32> to vector<128x128xf32>
      %35 = arith.addf %32, %34 : vector<128x128xf32>
      %cst_24 = arith.constant 0.000000e+00 : f32
      %36 = vector.broadcast %cst_24 : f32 to vector<128x128xf32>
      %37 = arith.maximumf %35, %36 : vector<128x128xf32>
      %38 = arith.truncf %37 : vector<128x128xf32> to vector<128x128xbf16>
      %c0_25 = arith.constant 0 : index
      %c0_26 = arith.constant 0 : index
      %39 = vector.load %arg8[%c0_25, %c0_26] : memref<128x128xbf16, #tpu.memory_space<vmem>>, vector<128x128xbf16>
      tpu.vector_store %arg8[%c0_25, %c0_26], %38 {strides = array<i32>} : memref<128x128xbf16, #tpu.memory_space<vmem>>, vector<128x128xbf16>,
    } else {
    }
    return
  }
  func.func @transform_0(%arg0: i32, %arg1: i32) -> (i32, i32) {
    %c0_i32 = arith.constant 0 : i32
    return %arg0, %arg1 : i32, i32
  }
  func.func @transform_1(%arg0: i32, %arg1: i32) -> (i32, i32) {
    %c0_i32 = arith.constant 0 : i32
    %c0_i32_0 = arith.constant 0 : i32
    %c0_i32_1 = arith.constant 0 : i32
    return %c0_i32, %c0_i32_0 : i32, i32
  }
  func.func @transform_2(%arg0: i32, %arg1: i32) -> (i32, i32) {
    %c0_i32 = arith.constant 0 : i32
    %c0_i32_0 = arith.constant 0 : i32
    %c0_i32_1 = arith.constant 0 : i32
    return %c0_i32, %c0_i32_0 : i32, i32
  }
  func.func @transform_3(%arg0: i32, %arg1: i32) -> (i32, i32) {
    %c0_i32 = arith.constant 0 : i32
    %c0_i32_0 = arith.constant 0 : i32
    %c0_i32_1 = arith.constant 0 : i32
    return %c0_i32, %c0_i32_0 : i32, i32
  }
  func.func @transform_4(%arg0: i32, %arg1: i32) -> (i32, i32) {
    %c0_i32 = arith.constant 0 : i32
    %c0_i32_0 = arith.constant 0 : i32
    %c0_i32_1 = arith.constant 0 : i32
    return %c0_i32, %c0_i32_0 : i32, i32
  }
  func.func @transform_5(%arg0: i32, %arg1: i32) -> (i32, i32) {
    %c0_i32 = arith.constant 0 : i32
    %c0_i32_0 = arith.constant 0 : i32
    %c0_i32_1 = arith.constant 0 : i32
    return %c0_i32, %c0_i32_0 : i32, i32
  }
  func.func @transform_6(%arg0: i32, %arg1: i32) -> (i32, i32) {
    %c0_i32 = arith.constant 0 : i32
    %c0_i32_0 = arith.constant 0 : i32
    return %arg0, %c0_i32 : i32, i32
  }
}

</mosaic_0001>

<llo_original>
// kernel: tpu_custom_call.1
$region0: #{tpu_custom_call.1}
  #allocation0 [shape = 'u32[]', space=smem, size = 0x4, offset = 0x4, fixed_abs, tag = 'smem constant byte address 0x4 - core index']
  #allocation1 [shape = 'u32[144,128]{1,0:T(1,128)}', space=vmem, size = 0x12000, scoped, tag = 'internal scratch']
  #allocation2 [shape = 'f32[128,128]{1,0:T(8,128)}', space=vmem, size = 0x10000, scoped, tag = 'scratch operand']
  %s0 = inlined_call_operand.hbm [shape: bf16[128,128], index: 0, kind: input, shape index: {}]
  %s1 = inlined_call_operand.hbm [shape: bf16[128,128], index: 1, kind: input, shape index: {}]
  %s2 = inlined_call_operand.hbm [shape: bf16[128,128], index: 2, kind: input, shape index: {}]
  %s3 = inlined_call_operand.vmem [shape: f32[1,128], index: 3, kind: input, shape index: {}]
  %s4 = inlined_call_operand.hbm [shape: bf16[128,128], index: 4, kind: input, shape index: {}]
  %s5 = inlined_call_operand.vmem [shape: f32[1,128], index: 5, kind: input, shape index: {}]
  %s6 = inlined_call_operand.hbm [shape: bf16[128,128], index: 6, kind: output, shape index: {}]
  %s7 = sld [smem:[#allocation0]]
  $region58: #{tpu_custom_call.1} parent=0
    _
  %s9 = ssub.s32 1, %s7
  %s10 = scalar_select 0, %s9, %s7
  $region1: #{tpu_custom_call.1} parent=0
    #allocation3 [shape = 'u8[32768]{0}', space=vmem, size = 0x8000, scoped, tag = 'input window, operand 0, single buffered']
    #allocation4 [shape = 's32[1]{0}', space=sflag, size = 0x4, scoped, tag = 'scoped memory for tpu_custom_call.1']
    #allocation5 [shape = 's32[1]{0}', space=sflag, size = 0x4, scoped, tag = 'scoped memory for tpu_custom_call.1']
    #allocation6 [shape = 'u8[32768]{0}', space=vmem, size = 0x8000, scoped, tag = 'input window, operand 1, single buffered']
    #allocation7 [shape = 's32[1]{0}', space=sflag, size = 0x4, scoped, tag = 'scoped memory for tpu_custom_call.1']
    #allocation8 [shape = 'u8[32768]{0}', space=vmem, size = 0x8000, scoped, tag = 'input window, operand 2, single buffered']
    #allocation9 [shape = 'u8[32768]{0}', space=vmem, size = 0x8000, scoped, tag = 'input window, operand 4, single buffered']
    #allocation10 [shape = 's32[1]{0}', space=sflag, size = 0x4, scoped, tag = 'scoped memory for tpu_custom_call.1']
    #allocation11 [shape = 'u8[32768]{0}', space=vmem, size = 0x8000, scoped, tag = 'output window, operand 0, single buffered']
    %11 = vsyncpa [#allocation4], 0
    %12 = vsyncpa [#allocation7], 0
    %13 = vsyncpa [#allocation10], 0
    %14 = vsyncpa [#allocation5], 0
    // Predicated region
    $region2: #{tpu_custom_call.1} parent=1 // pred_check
      _
    $region3: #{tpu_custom_call.1} parent=1 // pred_check_branch
      %16 = sbr.rel (0) target = $region5
    $region4: #{tpu_custom_call.1} parent=1 // pred_region
      %s18 = ssub.s32 1024, 1024
      %19 = vsyncadd [#allocation4], %s18
      %s20 = sshll.u32 [#allocation3], 4
      %s21 = int_to_ptr.vmem [resolvable:$true] %s20
      %26 = dma.hbm_to_vmem [thread:$0]  %s0, 1024, %s21, [#allocation4], 64, 64, 4
    $region5: #{tpu_custom_call.1} parent=1 // pred_fallthru
      _
    // Predicated region
    $region6: #{tpu_custom_call.1} parent=1 // pred_check
      _
    $region7: #{tpu_custom_call.1} parent=1 // pred_check_branch
      %28 = sbr.rel (0) target = $region9
    $region8: #{tpu_custom_call.1} parent=1 // pred_region
      %s30 = ssub.s32 1024, 1024
      %31 = vsyncadd [#allocation7], %s30
      %s32 = sshll.u32 [#allocation6], 4
      %s33 = int_to_ptr.vmem [resolvable:$true] %s32
      %38 = dma.hbm_to_vmem [thread:$0]  %s1, 1024, %s33, [#allocation7], 64, 64, 4
    $region9: #{tpu_custom_call.1} parent=1 // pred_fallthru
      _
    // Predicated region
    $region10: #{tpu_custom_call.1} parent=1 // pred_check
      _
    $region11: #{tpu_custom_call.1} parent=1 // pred_check_branch
      %40 = sbr.rel (0) target = $region13
    $region12: #{tpu_custom_call.1} parent=1 // pred_region
      %s42 = ssub.s32 1024, 1024
      %43 = vsyncadd [#allocation7], %s42
      %s44 = sshll.u32 [#allocation8], 4
      %s45 = int_to_ptr.vmem [resolvable:$true] %s44
      %50 = dma.hbm_to_vmem [thread:$0]  %s2, 1024, %s45, [#allocation7], 64, 64, 4
    $region13: #{tpu_custom_call.1} parent=1 // pred_fallthru
      _
    // Predicated region
    $region14: #{tpu_custom_call.1} parent=1 // pred_check
      _
    $region15: #{tpu_custom_call.1} parent=1 // pred_check_branch
      %52 = sbr.rel (0) target = $region17
    $region16: #{tpu_custom_call.1} parent=1 // pred_region
      _
    $region17: #{tpu_custom_call.1} parent=1 // pred_fallthru
      _
    // Predicated region
    $region18: #{tpu_custom_call.1} parent=1 // pred_check
      _
    $region19: #{tpu_custom_call.1} parent=1 // pred_check_branch
      %54 = sbr.rel (0) target = $region21
    $region20: #{tpu_custom_call.1} parent=1 // pred_region
      %s56 = ssub.s32 1024, 1024
      %57 = vsyncadd [#allocation10], %s56
      %s58 = sshll.u32 [#allocation9], 4
      %s59 = int_to_ptr.vmem [resolvable:$true] %s58
      %64 = dma.hbm_to_vmem [thread:$0]  %s4, 1024, %s59, [#allocation10], 64, 64, 4
    $region21: #{tpu_custom_call.1} parent=1 // pred_fallthru
      _
    // Predicated region
    $region22: #{tpu_custom_call.1} parent=1 // pred_check
      _
    $region23: #{tpu_custom_call.1} parent=1 // pred_check_branch
      %66 = sbr.rel (0) target = $region25
    $region24: #{tpu_custom_call.1} parent=1 // pred_region
      _
    $region25: #{tpu_custom_call.1} parent=1 // pred_fallthru
      _
    // Predicated region
    $region26: #{tpu_custom_call.1} parent=1 // pred_check
      _
    $region27: #{tpu_custom_call.1} parent=1 // pred_check_branch
      %68 = sbr.rel (0) target = $region29
    $region28: #{tpu_custom_call.1} parent=1 // pred_region
      %69 = dma.done [#allocation4], 1024
    $region29: #{tpu_custom_call.1} parent=1 // pred_fallthru
      _
    // Predicated region
    $region30: #{tpu_custom_call.1} parent=1 // pred_check
      _
    $region31: #{tpu_custom_call.1} parent=1 // pred_check_branch
      %71 = sbr.rel (0) target = $region33
    $region32: #{tpu_custom_call.1} parent=1 // pred_region
      %72 = dma.done [#allocation7], 1024
    $region33: #{tpu_custom_call.1} parent=1 // pred_fallthru
      _
    // Predicated region
    $region34: #{tpu_custom_call.1} parent=1 // pred_check
      _
    $region35: #{tpu_custom_call.1} parent=1 // pred_check_branch
      %74 = sbr.rel (0) target = $region37
    $region36: #{tpu_custom_call.1} parent=1 // pred_region
      %75 = dma.done [#allocation7], 1024
    $region37: #{tpu_custom_call.1} parent=1 // pred_fallthru
      _
    // Predicated region
    $region38: #{tpu_custom_call.1} parent=1 // pred_check
      _
    $region39: #{tpu_custom_call.1} parent=1 // pred_check_branch
      %77 = sbr.rel (0) target = $region41
    $region40: #{tpu_custom_call.1} parent=1 // pred_region
      %78 = dma.done [#allocation10], 1024
    $region41: #{tpu_custom_call.1} parent=1 // pred_fallthru
      _
    %p80 = scmp.eq.s32.totalorder 0, 0
    // Predicated region
    $region42: #{tpu_custom_call.1} parent=1 // pred_check
      %p81 = pneg %p80
    $region43: #{tpu_custom_call.1} parent=1 // pred_check_branch
      %83 = sbr.rel (%p81) target = $region45
    $region44: #{tpu_custom_call.1} parent=1 // pred_region
      %84 = vst [vmem:[#allocation2] sm:$0xff] 0.0
      %85 = vst [vmem:[#allocation2 + $0x8] sm:$0xff] 0.0
      %86 = vst [vmem:[#allocation2 + $0x10] sm:$0xff] 0.0
      %87 = vst [vmem:[#allocation2 + $0x18] sm:$0xff] 0.0
      %88 = vst [vmem:[#allocation2 + $0x20] sm:$0xff] 0.0
      %89 = vst [vmem:[#allocation2 + $0x28] sm:$0xff] 0.0
      %90 = vst [vmem:[#allocation2 + $0x30] sm:$0xff] 0.0
      %91 = vst [vmem:[#allocation2 + $0x38] sm:$0xff] 0.0
      %92 = vst [vmem:[#allocation2 + $0x40] sm:$0xff] 0.0
      %93 = vst [vmem:[#allocation2 + $0x48] sm:$0xff] 0.0
      %94 = vst [vmem:[#allocation2 + $0x50] sm:$0xff] 0.0
      %95 = vst [vmem:[#allocation2 + $0x58] sm:$0xff] 0.0
      %96 = vst [vmem:[#allocation2 + $0x60] sm:$0xff] 0.0
      %97 = vst [vmem:[#allocation2 + $0x68] sm:$0xff] 0.0
      %98 = vst [vmem:[#allocation2 + $0x70] sm:$0xff] 0.0
      %99 = vst [vmem:[#allocation2 + $0x78] sm:$0xff] 0.0
    $region45: #{tpu_custom_call.1} parent=1 // pred_fallthru
      _
    %s100 = smul.u32 0, 128
    %v101 = vld [vmem:[#allocation2] sm:$0xff]
    %v102 = vld [vmem:[#allocation2 + $0x8] sm:$0xff]
    %v103 = vld [vmem:[#allocation2 + $0x10] sm:$0xff]
    %v104 = vld [vmem:[#allocation2 + $0x18] sm:$0xff]
    %v105 = vld [vmem:[#allocation2 + $0x20] sm:$0xff]
    %v106 = vld [vmem:[#allocation2 + $0x28] sm:$0xff]
    %v107 = vld [vmem:[#allocation2 + $0x30] sm:$0xff]
    %v108 = vld [vmem:[#allocation2 + $0x38] sm:$0xff]
    %v109 = vld [vmem:[#allocation2 + $0x40] sm:$0xff]
    %v110 = vld [vmem:[#allocation2 + $0x48] sm:$0xff]
    %v111 = vld [vmem:[#allocation2 + $0x50] sm:$0xff]
    %v112 = vld [vmem:[#allocation2 + $0x58] sm:$0xff]
    %v113 = vld [vmem:[#allocation2 + $0x60] sm:$0xff]
    %v114 = vld [vmem:[#allocation2 + $0x68] sm:$0xff]
    %v115 = vld [vmem:[#allocation2 + $0x70] sm:$0xff]
    %v116 = vld [vmem:[#allocation2 + $0x78] sm:$0xff]
    %v117 = vld [vmem:[#allocation3] sm:$0xf]
    %v118 = vld [vmem:[#allocation3 + $0x4] sm:$0xf]
    %v119 = vld [vmem:[#allocation3 + $0x8] sm:$0xf]
    %v120 = vld [vmem:[#allocation3 + $0xc] sm:$0xf]
    %v121 = vld [vmem:[#allocation3 + $0x10] sm:$0xf]
    %v122 = vld [vmem:[#allocation3 + $0x14] sm:$0xf]
    %v123 = vld [vmem:[#allocation3 + $0x18] sm:$0xf]
    %v124 = vld [vmem:[#allocation3 + $0x1c] sm:$0xf]
    %v125 = vld [vmem:[#allocation3 + $0x20] sm:$0xf]
    %v126 = vld [vmem:[#allocation3 + $0x24] sm:$0xf]
    %v127 = vld [vmem:[#allocation3 + $0x28] sm:$0xf]
    %v128 = vld [vmem:[#allocation3 + $0x2c] sm:$0xf]
    %v129 = vld [vmem:[#allocation3 + $0x30] sm:$0xf]
    %v130 = vld [vmem:[#allocation3 + $0x34] sm:$0xf]
    %v131 = vld [vmem:[#allocation3 + $0x38] sm:$0xf]
    %v132 = vld [vmem:[#allocation3 + $0x3c] sm:$0xf]
    %s133 = sshra.s32 %s100, 3
    %s134 = sand.u32 %s100, 7
    %s135 = smul.addr %s133, 4
    %s136 = scalar_lea.vmem [#allocation6], %s135
    %v137 = vld [vmem:[%s136] sm:$0xf]
    %v138 = vld [vmem:[%s136 + $0x4] sm:$0xf]
    %v139 = vld [vmem:[%s136 + $0x8] sm:$0xf]
    %v140 = vld [vmem:[%s136 + $0xc] sm:$0xf]
    %v141 = vld [vmem:[%s136 + $0x10] sm:$0xf]
    %v142 = vld [vmem:[%s136 + $0x14] sm:$0xf]
    %v143 = vld [vmem:[%s136 + $0x18] sm:$0xf]
    %v144 = vld [vmem:[%s136 + $0x1c] sm:$0xf]
    %v145 = vld [vmem:[%s136 + $0x20] sm:$0xf]
    %v146 = vld [vmem:[%s136 + $0x24] sm:$0xf]
    %v147 = vld [vmem:[%s136 + $0x28] sm:$0xf]
    %v148 = vld [vmem:[%s136 + $0x2c] sm:$0xf]
    %v149 = vld [vmem:[%s136 + $0x30] sm:$0xf]
    %v150 = vld [vmem:[%s136 + $0x34] sm:$0xf]
    %v151 = vld [vmem:[%s136 + $0x38] sm:$0xf]
    %v152 = vld [vmem:[%s136 + $0x3c] sm:$0xf]
    %v169 = vunpack.c.l.b16 %v117
    %v170 = vunpack.c.l.b16 %v118
    %v171 = vunpack.c.l.b16 %v119
    %v172 = vunpack.c.l.b16 %v120
    %v173 = vunpack.c.l.b16 %v121
    %v174 = vunpack.c.l.b16 %v122
    %v175 = vunpack.c.l.b16 %v123
    %v176 = vunpack.c.l.b16 %v124
    %v177 = vunpack.c.l.b16 %v125
    %v178 = vunpack.c.l.b16 %v126
    %v179 = vunpack.c.l.b16 %v127
    %v180 = vunpack.c.l.b16 %v128
    %v181 = vunpack.c.l.b16 %v129
    %v182 = vunpack.c.l.b16 %v130
    %v183 = vunpack.c.l.b16 %v131
    %v184 = vunpack.c.l.b16 %v132
    %v185 = vpack.c.b16 %v170, %v169
    %v186 = vpack.c.b16 %v172, %v171
    %v187 = vpack.c.b16 %v174, %v173
    %v188 = vpack.c.b16 %v176, %v175
    %v189 = vpack.c.b16 %v178, %v177
    %v190 = vpack.c.b16 %v180, %v179
    %v191 = vpack.c.b16 %v182, %v181
    %v192 = vpack.c.b16 %v184, %v183
    %v217 = vunpack.c.l.b16 %v137
    %v218 = vunpack.c.l.b16 %v138
    %v219 = vunpack.c.l.b16 %v139
    %v220 = vunpack.c.l.b16 %v140
    %v221 = vunpack.c.l.b16 %v141
    %v222 = vunpack.c.l.b16 %v142
    %v223 = vunpack.c.l.b16 %v143
    %v224 = vunpack.c.l.b16 %v144
    %v225 = vunpack.c.l.b16 %v145
    %v226 = vunpack.c.l.b16 %v146
    %v227 = vunpack.c.l.b16 %v147
    %v228 = vunpack.c.l.b16 %v148
    %v229 = vunpack.c.l.b16 %v149
    %v230 = vunpack.c.l.b16 %v150
    %v231 = vunpack.c.l.b16 %v151
    %v232 = vunpack.c.l.b16 %v152
    %v233 = vpack.c.b16 %v218, %v217
    %v234 = vpack.c.b16 %v220, %v219
    %v235 = vpack.c.b16 %v222, %v221
    %v236 = vpack.c.b16 %v224, %v223
    %v237 = vpack.c.b16 %v226, %v225
    %v238 = vpack.c.b16 %v228, %v227
    %v239 = vpack.c.b16 %v230, %v229
    %v240 = vpack.c.b16 %v232, %v231
    %249 = vmatprep.subr.bf16.mxu0 0
    %250 = vmatpush1.bf16.msra.mxu0 %v233
    %251 = vmatprep.subr.bf16.mxu0 0
    %252 = vmatpush1.bf16.msra.mxu0 %v234
    %253 = vmatprep.subr.bf16.mxu0 0
    %254 = vmatpush1.bf16.msra.mxu0 %v235
    %255 = vmatprep.subr.bf16.mxu0 0
    %256 = vmatpush1.bf16.msra.mxu0 %v236
    %257 = vmatprep.subr.bf16.mxu0 0
    %258 = vmatpush1.bf16.msra.mxu0 %v237
    %259 = vmatprep.subr.bf16.mxu0 0
    %260 = vmatpush1.bf16.msra.mxu0 %v238
    %261 = vmatprep.subr.bf16.mxu0 0
    %262 = vmatpush1.bf16.msra.mxu0 %v239
    %263 = vmatprep.subr.bf16.mxu0 0
    %264 = vmatpush1.bf16.msra.mxu0 %v240
    %265 = vmatprep.subr.bf16.mxu0 0
    %266 = vmatpush1.bf16.msra.mxu0 0
    %267 = vmatprep.subr.bf16.mxu0 0
    %268 = vmatpush1.bf16.msra.mxu0 0
    %269 = vmatprep.subr.bf16.mxu0 0
    %270 = vmatpush1.bf16.msra.mxu0 0
    %271 = vmatprep.subr.bf16.mxu0 0
    %272 = vmatpush1.bf16.msra.mxu0 0
    %273 = vmatprep.subr.bf16.mxu0 0
    %274 = vmatpush1.bf16.msra.mxu0 0
    %275 = vmatprep.subr.bf16.mxu0 0
    %276 = vmatpush1.bf16.msra.mxu0 0
    %277 = vmatprep.subr.bf16.mxu0 0
    %278 = vmatpush1.bf16.msra.mxu0 0
    %279 = vmatprep.subr.bf16.mxu0 0
    %280 = vmatpush1.bf16.msra.mxu0 0
    %281 = vmatprep.mubr.bf16.mxu0 0
    %282 = vmatmul.mubr.bf16.gmra.mrb[0].mxu0 %v185
    %v283 = vpop.f32.mrb[0].mxu0
    %v284 = vadd.f32 0.0, %v283
    %v285 = vpop.f32.mrb[0].mxu0
    %v286 = vpop.f32.mrb[0].mxu0
    %v287 = vadd.f32 0.0, %v286
    %v288 = vpop.f32.mrb[0].mxu0
    %289 = vmatprep.mubr.bf16.mxu0 0
    %290 = vmatmul.mubr.bf16.gmra.mrb[0].mxu0 %v186
    %v291 = vpop.f32.mrb[0].mxu0
    %v292 = vadd.f32 0.0, %v291
    %v293 = vpop.f32.mrb[0].mxu0
    %v294 = vpop.f32.mrb[0].mxu0
    %v295 = vadd.f32 0.0, %v294
    %v296 = vpop.f32.mrb[0].mxu0
    %297 = vmatprep.mubr.bf16.mxu0 0
    %298 = vmatmul.mubr.bf16.gmra.mrb[0].mxu0 %v187
    %v299 = vpop.f32.mrb[0].mxu0
    %v300 = vadd.f32 0.0, %v299
    %v301 = vpop.f32.mrb[0].mxu0
    %v302 = vpop.f32.mrb[0].mxu0
    %v303 = vadd.f32 0.0, %v302
    %v304 = vpop.f32.mrb[0].mxu0
    %305 = vmatprep.mubr.bf16.mxu0 0
    %306 = vmatmul.mubr.bf16.gmra.mrb[0].mxu0 %v188
    %v307 = vpop.f32.mrb[0].mxu0
    %v308 = vadd.f32 0.0, %v307
    %v309 = vpop.f32.mrb[0].mxu0
    %v310 = vpop.f32.mrb[0].mxu0
    %v311 = vadd.f32 0.0, %v310
    %v312 = vpop.f32.mrb[0].mxu0
    %313 = vmatprep.mubr.bf16.mxu0 0
    %314 = vmatmul.mubr.bf16.gmra.mrb[0].mxu0 %v189
    %v315 = vpop.f32.mrb[0].mxu0
    %v316 = vadd.f32 0.0, %v315
    %v317 = vpop.f32.mrb[0].mxu0
    %v318 = vpop.f32.mrb[0].mxu0
    %v319 = vadd.f32 0.0, %v318
    %v320 = vpop.f32.mrb[0].mxu0
    %321 = vmatprep.mubr.bf16.mxu0 0
    %322 = vmatmul.mubr.bf16.gmra.mrb[0].mxu0 %v190
    %v323 = vpop.f32.mrb[0].mxu0
    %v324 = vadd.f32 0.0, %v323
    %v325 = vpop.f32.mrb[0].mxu0
    %v326 = vpop.f32.mrb[0].mxu0
    %v327 = vadd.f32 0.0, %v326
    %v328 = vpop.f32.mrb[0].mxu0
    %329 = vmatprep.mubr.bf16.mxu0 0
    %330 = vmatmul.mubr.bf16.gmra.mrb[0].mxu0 %v191
    %v331 = vpop.f32.mrb[0].mxu0
    %v332 = vadd.f32 0.0, %v331
    %v333 = vpop.f32.mrb[0].mxu0
    %v334 = vpop.f32.mrb[0].mxu0
    %v335 = vadd.f32 0.0, %v334
    %v336 = vpop.f32.mrb[0].mxu0
    %337 = vmatprep.mubr.bf16.mxu0 0
    %338 = vmatmul.mubr.bf16.gmra.mrb[0].mxu0 %v192
    %v339 = vpop.f32.mrb[0].mxu0
    %v340 = vadd.f32 0.0, %v339
    %v341 = vpop.f32.mrb[0].mxu0
    %v342 = vpop.f32.mrb[0].mxu0
    %v343 = vadd.f32 0.0, %v342
    %v344 = vpop.f32.mrb[0].mxu0
    %345 = vdwg.mxu0
    %v346 = vadd.f32 %v101, %v284
    %v347 = vadd.f32 %v102, %v287
    %v348 = vadd.f32 %v103, %v292
    %v349 = vadd.f32 %v104, %v295
    %v350 = vadd.f32 %v105, %v300
    %v351 = vadd.f32 %v106, %v303
    %v352 = vadd.f32 %v107, %v308
    %v353 = vadd.f32 %v108, %v311
    %v354 = vadd.f32 %v109, %v316
    %v355 = vadd.f32 %v110, %v319
    %v356 = vadd.f32 %v111, %v324
    %v357 = vadd.f32 %v112, %v327
    %v358 = vadd.f32 %v113, %v332
    %v359 = vadd.f32 %v114, %v335
    %v360 = vadd.f32 %v115, %v340
    %v361 = vadd.f32 %v116, %v343
    %362 = vst [vmem:[#allocation2] sm:$0xff] %v346
    %363 = vst [vmem:[#allocation2 + $0x8] sm:$0xff] %v347
    %364 = vst [vmem:[#allocation2 + $0x10] sm:$0xff] %v348
    %365 = vst [vmem:[#allocation2 + $0x18] sm:$0xff] %v349
    %366 = vst [vmem:[#allocation2 + $0x20] sm:$0xff] %v350
    %367 = vst [vmem:[#allocation2 + $0x28] sm:$0xff] %v351
    %368 = vst [vmem:[#allocation2 + $0x30] sm:$0xff] %v352
    %369 = vst [vmem:[#allocation2 + $0x38] sm:$0xff] %v353
    %370 = vst [vmem:[#allocation2 + $0x40] sm:$0xff] %v354
    %371 = vst [vmem:[#allocation2 + $0x48] sm:$0xff] %v355
    %372 = vst [vmem:[#allocation2 + $0x50] sm:$0xff] %v356
    %373 = vst [vmem:[#allocation2 + $0x58] sm:$0xff] %v357
    %374 = vst [vmem:[#allocation2 + $0x60] sm:$0xff] %v358
    %375 = vst [vmem:[#allocation2 + $0x68] sm:$0xff] %v359
    %376 = vst [vmem:[#allocation2 + $0x70] sm:$0xff] %v360
    %377 = vst [vmem:[#allocation2 + $0x78] sm:$0xff] %v361
    // Predicated region
    $region46: #{tpu_custom_call.1} parent=1 // pred_check
      %p378 = pneg %p80
    $region47: #{tpu_custom_call.1} parent=1 // pred_check_branch
      %380 = sbr.rel (%p378) target = $region49
    $region48: #{tpu_custom_call.1} parent=1 // pred_region
      %s381 = smul.u32 0, 128
      %v382 = vld [vmem:[#allocation2] sm:$0xff]
      %v383 = vld [vmem:[#allocation2 + $0x8] sm:$0xff]
      %v384 = vld [vmem:[#allocation2 + $0x10] sm:$0xff]
      %v385 = vld [vmem:[#allocation2 + $0x18] sm:$0xff]
      %v386 = vld [vmem:[#allocation2 + $0x20] sm:$0xff]
      %v387 = vld [vmem:[#allocation2 + $0x28] sm:$0xff]
      %v388 = vld [vmem:[#allocation2 + $0x30] sm:$0xff]
      %v389 = vld [vmem:[#allocation2 + $0x38] sm:$0xff]
      %v390 = vld [vmem:[#allocation2 + $0x40] sm:$0xff]
      %v391 = vld [vmem:[#allocation2 + $0x48] sm:$0xff]
      %v392 = vld [vmem:[#allocation2 + $0x50] sm:$0xff]
      %v393 = vld [vmem:[#allocation2 + $0x58] sm:$0xff]
      %v394 = vld [vmem:[#allocation2 + $0x60] sm:$0xff]
      %v395 = vld [vmem:[#allocation2 + $0x68] sm:$0xff]
      %v396 = vld [vmem:[#allocation2 + $0x70] sm:$0xff]
      %v397 = vld [vmem:[#allocation2 + $0x78] sm:$0xff]
      %s398 = sshra.s32 %s381, 3
      %s399 = sand.u32 %s381, 7
      %s400 = smul.addr %s398, 4
      %s401 = scalar_lea.vmem [#allocation6], %s400
      %v402 = vld [vmem:[%s401] sm:$0xf]
      %v403 = vld [vmem:[%s401 + $0x4] sm:$0xf]
      %v404 = vld [vmem:[%s401 + $0x8] sm:$0xf]
      %v405 = vld [vmem:[%s401 + $0xc] sm:$0xf]
      %v406 = vld [vmem:[%s401 + $0x10] sm:$0xf]
      %v407 = vld [vmem:[%s401 + $0x14] sm:$0xf]
      %v408 = vld [vmem:[%s401 + $0x18] sm:$0xf]
      %v409 = vld [vmem:[%s401 + $0x1c] sm:$0xf]
      %v410 = vld [vmem:[%s401 + $0x20] sm:$0xf]
      %v411 = vld [vmem:[%s401 + $0x24] sm:$0xf]
      %v412 = vld [vmem:[%s401 + $0x28] sm:$0xf]
      %v413 = vld [vmem:[%s401 + $0x2c] sm:$0xf]
      %v414 = vld [vmem:[%s401 + $0x30] sm:$0xf]
      %v415 = vld [vmem:[%s401 + $0x34] sm:$0xf]
      %v416 = vld [vmem:[%s401 + $0x38] sm:$0xf]
      %v417 = vld [vmem:[%s401 + $0x3c] sm:$0xf]
      %v418 = vunpack.c.l.bf16 %v402
      %v419 = vunpack.c.l.bf16 %v403
      %v420 = vunpack.c.l.bf16 %v404
      %v421 = vunpack.c.l.bf16 %v405
      %v422 = vunpack.c.l.bf16 %v406
      %v423 = vunpack.c.l.bf16 %v407
      %v424 = vunpack.c.l.bf16 %v408
      %v425 = vunpack.c.l.bf16 %v409
      %v426 = vunpack.c.l.bf16 %v410
      %v427 = vunpack.c.l.bf16 %v411
      %v428 = vunpack.c.l.bf16 %v412
      %v429 = vunpack.c.l.bf16 %v413
      %v430 = vunpack.c.l.bf16 %v414
      %v431 = vunpack.c.l.bf16 %v415
      %v432 = vunpack.c.l.bf16 %v416
      %v433 = vunpack.c.l.bf16 %v417
      %v434 = vadd.f32 %v382, %v418
      %v435 = vadd.f32 %v383, %v419
      %v436 = vadd.f32 %v384, %v420
      %v437 = vadd.f32 %v385, %v421
      %v438 = vadd.f32 %v386, %v422
      %v439 = vadd.f32 %v387, %v423
      %v440 = vadd.f32 %v388, %v424
      %v441 = vadd.f32 %v389, %v425
      %v442 = vadd.f32 %v390, %v426
      %v443 = vadd.f32 %v391, %v427
      %v444 = vadd.f32 %v392, %v428
      %v445 = vadd.f32 %v393, %v429
      %v446 = vadd.f32 %v394, %v430
      %v447 = vadd.f32 %v395, %v431
      %v448 = vadd.f32 %v396, %v432
      %v449 = vadd.f32 %v397, %v433
      %v450 = vpack.c.bf16 %v435, %v434
      %v451 = vpack.c.bf16 %v437, %v436
      %v452 = vpack.c.bf16 %v439, %v438
      %v453 = vpack.c.bf16 %v441, %v440
      %v454 = vpack.c.bf16 %v443, %v442
      %v455 = vpack.c.bf16 %v445, %v444
      %v456 = vpack.c.bf16 %v447, %v446
      %v457 = vpack.c.bf16 %v449, %v448
      %v458 = vld [vmem:[#allocation8] sm:$0xf]
      %v459 = vld [vmem:[#allocation8 + $0x4] sm:$0xf]
      %v460 = vld [vmem:[#allocation8 + $0x8] sm:$0xf]
      %v461 = vld [vmem:[#allocation8 + $0xc] sm:$0xf]
      %v462 = vld [vmem:[#allocation8 + $0x10] sm:$0xf]
      %v463 = vld [vmem:[#allocation8 + $0x14] sm:$0xf]
      %v464 = vld [vmem:[#allocation8 + $0x18] sm:$0xf]
      %v465 = vld [vmem:[#allocation8 + $0x1c] sm:$0xf]
      %v466 = vld [vmem:[#allocation8 + $0x20] sm:$0xf]
      %v467 = vld [vmem:[#allocation8 + $0x24] sm:$0xf]
      %v468 = vld [vmem:[#allocation8 + $0x28] sm:$0xf]
      %v469 = vld [vmem:[#allocation8 + $0x2c] sm:$0xf]
      %v470 = vld [vmem:[#allocation8 + $0x30] sm:$0xf]
      %v471 = vld [vmem:[#allocation8 + $0x34] sm:$0xf]
      %v472 = vld [vmem:[#allocation8 + $0x38] sm:$0xf]
      %v473 = vld [vmem:[#allocation8 + $0x3c] sm:$0xf]
      %v474 = vld [vmem:[%s3] sm:$0x1]
      %v476 = vlaneseq
      %v477 = vshrl.u32 %v476, 7
      %v478 = vsub.s32 0, %v477
      %v479 = vrot.slane %v474, %v478
      %v497 = vunpack.c.l.b16 %v458
      %v498 = vunpack.c.l.b16 %v459
      %v499 = vunpack.c.l.b16 %v460
      %v500 = vunpack.c.l.b16 %v461
      %v501 = vunpack.c.l.b16 %v462
      %v502 = vunpack.c.l.b16 %v463
      %v503 = vunpack.c.l.b16 %v464
      %v504 = vunpack.c.l.b16 %v465
      %v505 = vunpack.c.l.b16 %v466
      %v506 = vunpack.c.l.b16 %v467
      %v507 = vunpack.c.l.b16 %v468
      %v508 = vunpack.c.l.b16 %v469
      %v509 = vunpack.c.l.b16 %v470
      %v510 = vunpack.c.l.b16 %v471
      %v511 = vunpack.c.l.b16 %v472
      %v512 = vunpack.c.l.b16 %v473
      %v513 = vpack.c.b16 %v498, %v497
      %v514 = vpack.c.b16 %v500, %v499
      %v515 = vpack.c.b16 %v502, %v501
      %v516 = vpack.c.b16 %v504, %v503
      %v517 = vpack.c.b16 %v506, %v505
      %v518 = vpack.c.b16 %v508, %v507
      %v519 = vpack.c.b16 %v510, %v509
      %v520 = vpack.c.b16 %v512, %v511
      %529 = vmatprep.subr.bf16.mxu0 0
      %530 = vmatpush1.bf16.msra.mxu0 %v513
      %531 = vmatprep.subr.bf16.mxu0 0
      %532 = vmatpush1.bf16.msra.mxu0 %v514
      %533 = vmatprep.subr.bf16.mxu0 0
      %534 = vmatpush1.bf16.msra.mxu0 %v515
      %535 = vmatprep.subr.bf16.mxu0 0
      %536 = vmatpush1.bf16.msra.mxu0 %v516
      %537 = vmatprep.subr.bf16.mxu0 0
      %538 = vmatpush1.bf16.msra.mxu0 %v517
      %539 = vmatprep.subr.bf16.mxu0 0
      %540 = vmatpush1.bf16.msra.mxu0 %v518
      %541 = vmatprep.subr.bf16.mxu0 0
      %542 = vmatpush1.bf16.msra.mxu0 %v519
      %543 = vmatprep.subr.bf16.mxu0 0
      %544 = vmatpush1.bf16.msra.mxu0 %v520
      %545 = vmatprep.subr.bf16.mxu0 0
      %546 = vmatpush1.bf16.msra.mxu0 0
      %547 = vmatprep.subr.bf16.mxu0 0
      %548 = vmatpush1.bf16.msra.mxu0 0
      %549 = vmatprep.subr.bf16.mxu0 0
      %550 = vmatpush1.bf16.msra.mxu0 0
      %551 = vmatprep.subr.bf16.mxu0 0
      %552 = vmatpush1.bf16.msra.mxu0 0
      %553 = vmatprep.subr.bf16.mxu0 0
      %554 = vmatpush1.bf16.msra.mxu0 0
      %555 = vmatprep.subr.bf16.mxu0 0
      %556 = vmatpush1.bf16.msra.mxu0 0
      %557 = vmatprep.subr.bf16.mxu0 0
      %558 = vmatpush1.bf16.msra.mxu0 0
      %559 = vmatprep.subr.bf16.mxu0 0
      %560 = vmatpush1.bf16.msra.mxu0 0
      %561 = vmatprep.mubr.bf16.mxu0 0
      %562 = vmatmul.mubr.bf16.gmra.mrb[0].mxu0 %v450
      %v563 = vpop.f32.mrb[0].mxu0
      %v564 = vadd.f32 %v479, %v563
      %v565 = vpop.f32.mrb[0].mxu0
      %v566 = vpop.f32.mrb[0].mxu0
      %v567 = vadd.f32 %v479, %v566
      %v568 = vpop.f32.mrb[0].mxu0
      %569 = vmatprep.mubr.bf16.mxu0 0
      %570 = vmatmul.mubr.bf16.gmra.mrb[0].mxu0 %v451
      %v571 = vpop.f32.mrb[0].mxu0
      %v572 = vadd.f32 %v479, %v571
      %v573 = vpop.f32.mrb[0].mxu0
      %v574 = vpop.f32.mrb[0].mxu0
      %v575 = vadd.f32 %v479, %v574
      %v576 = vpop.f32.mrb[0].mxu0
      %577 = vmatprep.mubr.bf16.mxu0 0
      %578 = vmatmul.mubr.bf16.gmra.mrb[0].mxu0 %v452
      %v579 = vpop.f32.mrb[0].mxu0
      %v580 = vadd.f32 %v479, %v579
      %v581 = vpop.f32.mrb[0].mxu0
      %v582 = vpop.f32.mrb[0].mxu0
      %v583 = vadd.f32 %v479, %v582
      %v584 = vpop.f32.mrb[0].mxu0
      %585 = vmatprep.mubr.bf16.mxu0 0
      %586 = vmatmul.mubr.bf16.gmra.mrb[0].mxu0 %v453
      %v587 = vpop.f32.mrb[0].mxu0
      %v588 = vadd.f32 %v479, %v587
      %v589 = vpop.f32.mrb[0].mxu0
      %v590 = vpop.f32.mrb[0].mxu0
      %v591 = vadd.f32 %v479, %v590
      %v592 = vpop.f32.mrb[0].mxu0
      %593 = vmatprep.mubr.bf16.mxu0 0
      %594 = vmatmul.mubr.bf16.gmra.mrb[0].mxu0 %v454
      %v595 = vpop.f32.mrb[0].mxu0
      %v596 = vadd.f32 %v479, %v595
      %v597 = vpop.f32.mrb[0].mxu0
      %v598 = vpop.f32.mrb[0].mxu0
      %v599 = vadd.f32 %v479, %v598
      %v600 = vpop.f32.mrb[0].mxu0
      %601 = vmatprep.mubr.bf16.mxu0 0
      %602 = vmatmul.mubr.bf16.gmra.mrb[0].mxu0 %v455
      %v603 = vpop.f32.mrb[0].mxu0
      %v604 = vadd.f32 %v479, %v603
      %v605 = vpop.f32.mrb[0].mxu0
      %v606 = vpop.f32.mrb[0].mxu0
      %v607 = vadd.f32 %v479, %v606
      %v608 = vpop.f32.mrb[0].mxu0
      %609 = vmatprep.mubr.bf16.mxu0 0
      %610 = vmatmul.mubr.bf16.gmra.mrb[0].mxu0 %v456
      %v611 = vpop.f32.mrb[0].mxu0
      %v612 = vadd.f32 %v479, %v611
      %v613 = vpop.f32.mrb[0].mxu0
      %v614 = vpop.f32.mrb[0].mxu0
      %v615 = vadd.f32 %v479, %v614
      %v616 = vpop.f32.mrb[0].mxu0
      %617 = vmatprep.mubr.bf16.mxu0 0
      %618 = vmatmul.mubr.bf16.gmra.mrb[0].mxu0 %v457
      %v619 = vpop.f32.mrb[0].mxu0
      %v620 = vadd.f32 %v479, %v619
      %v621 = vpop.f32.mrb[0].mxu0
      %v622 = vpop.f32.mrb[0].mxu0
      %v623 = vadd.f32 %v479, %v622
      %v624 = vpop.f32.mrb[0].mxu0
      %625 = vdwg.mxu0
      %v626 = vmax.f32 %v564, 0.0
      %v627 = vmax.f32 %v567, 0.0
      %v628 = vmax.f32 %v572, 0.0
      %v629 = vmax.f32 %v575, 0.0
      %v630 = vmax.f32 %v580, 0.0
      %v631 = vmax.f32 %v583, 0.0
      %v632 = vmax.f32 %v588, 0.0
      %v633 = vmax.f32 %v591, 0.0
      %v634 = vmax.f32 %v596, 0.0
      %v635 = vmax.f32 %v599, 0.0
      %v636 = vmax.f32 %v604, 0.0
      %v637 = vmax.f32 %v607, 0.0
      %v638 = vmax.f32 %v612, 0.0
      %v639 = vmax.f32 %v615, 0.0
      %v640 = vmax.f32 %v620, 0.0
      %v641 = vmax.f32 %v623, 0.0
      %v642 = vpack.c.bf16 %v627, %v626
      %v643 = vpack.c.bf16 %v629, %v628
      %v644 = vpack.c.bf16 %v631, %v630
      %v645 = vpack.c.bf16 %v633, %v632
      %v646 = vpack.c.bf16 %v635, %v634
      %v647 = vpack.c.bf16 %v637, %v636
      %v648 = vpack.c.bf16 %v639, %v638
      %v649 = vpack.c.bf16 %v641, %v640
      %v650 = vld [vmem:[#allocation9] sm:$0xf]
      %v651 = vld [vmem:[#allocation9 + $0x4] sm:$0xf]
      %v652 = vld [vmem:[#allocation9 + $0x8] sm:$0xf]
      %v653 = vld [vmem:[#allocation9 + $0xc] sm:$0xf]
      %v654 = vld [vmem:[#allocation9 + $0x10] sm:$0xf]
      %v655 = vld [vmem:[#allocation9 + $0x14] sm:$0xf]
      %v656 = vld [vmem:[#allocation9 + $0x18] sm:$0xf]
      %v657 = vld [vmem:[#allocation9 + $0x1c] sm:$0xf]
      %v658 = vld [vmem:[#allocation9 + $0x20] sm:$0xf]
      %v659 = vld [vmem:[#allocation9 + $0x24] sm:$0xf]
      %v660 = vld [vmem:[#allocation9 + $0x28] sm:$0xf]
      %v661 = vld [vmem:[#allocation9 + $0x2c] sm:$0xf]
      %v662 = vld [vmem:[#allocation9 + $0x30] sm:$0xf]
      %v663 = vld [vmem:[#allocation9 + $0x34] sm:$0xf]
      %v664 = vld [vmem:[#allocation9 + $0x38] sm:$0xf]
      %v665 = vld [vmem:[#allocation9 + $0x3c] sm:$0xf]
      %v666 = vld [vmem:[%s5] sm:$0x1]
      %v668 = vlaneseq
      %v669 = vshrl.u32 %v668, 7
      %v670 = vsub.s32 0, %v669
      %v671 = vrot.slane %v666, %v670
      %v689 = vunpack.c.l.b16 %v650
      %v690 = vunpack.c.l.b16 %v651
      %v691 = vunpack.c.l.b16 %v652
      %v692 = vunpack.c.l.b16 %v653
      %v693 = vunpack.c.l.b16 %v654
      %v694 = vunpack.c.l.b16 %v655
      %v695 = vunpack.c.l.b16 %v656
      %v696 = vunpack.c.l.b16 %v657
      %v697 = vunpack.c.l.b16 %v658
      %v698 = vunpack.c.l.b16 %v659
      %v699 = vunpack.c.l.b16 %v660
      %v700 = vunpack.c.l.b16 %v661
      %v701 = vunpack.c.l.b16 %v662
      %v702 = vunpack.c.l.b16 %v663
      %v703 = vunpack.c.l.b16 %v664
      %v704 = vunpack.c.l.b16 %v665
      %v705 = vpack.c.b16 %v690, %v689
      %v706 = vpack.c.b16 %v692, %v691
      %v707 = vpack.c.b16 %v694, %v693
      %v708 = vpack.c.b16 %v696, %v695
      %v709 = vpack.c.b16 %v698, %v697
      %v710 = vpack.c.b16 %v700, %v699
      %v711 = vpack.c.b16 %v702, %v701
      %v712 = vpack.c.b16 %v704, %v703
      %721 = vmatprep.subr.bf16.mxu0 0
      %722 = vmatpush1.bf16.msra.mxu0 %v705
      %723 = vmatprep.subr.bf16.mxu0 0
      %724 = vmatpush1.bf16.msra.mxu0 %v706
      %725 = vmatprep.subr.bf16.mxu0 0
      %726 = vmatpush1.bf16.msra.mxu0 %v707
      %727 = vmatprep.subr.bf16.mxu0 0
      %728 = vmatpush1.bf16.msra.mxu0 %v708
      %729 = vmatprep.subr.bf16.mxu0 0
      %730 = vmatpush1.bf16.msra.mxu0 %v709
      %731 = vmatprep.subr.bf16.mxu0 0
      %732 = vmatpush1.bf16.msra.mxu0 %v710
      %733 = vmatprep.subr.bf16.mxu0 0
      %734 = vmatpush1.bf16.msra.mxu0 %v711
      %735 = vmatprep.subr.bf16.mxu0 0
      %736 = vmatpush1.bf16.msra.mxu0 %v712
      %737 = vmatprep.subr.bf16.mxu0 0
      %738 = vmatpush1.bf16.msra.mxu0 0
      %739 = vmatprep.subr.bf16.mxu0 0
      %740 = vmatpush1.bf16.msra.mxu0 0
      %741 = vmatprep.subr.bf16.mxu0 0
      %742 = vmatpush1.bf16.msra.mxu0 0
      %743 = vmatprep.subr.bf16.mxu0 0
      %744 = vmatpush1.bf16.msra.mxu0 0
      %745 = vmatprep.subr.bf16.mxu0 0
      %746 = vmatpush1.bf16.msra.mxu0 0
      %747 = vmatprep.subr.bf16.mxu0 0
      %748 = vmatpush1.bf16.msra.mxu0 0
      %749 = vmatprep.subr.bf16.mxu0 0
      %750 = vmatpush1.bf16.msra.mxu0 0
      %751 = vmatprep.subr.bf16.mxu0 0
      %752 = vmatpush1.bf16.msra.mxu0 0
      %753 = vmatprep.mubr.bf16.mxu0 0
      %754 = vmatmul.mubr.bf16.gmra.mrb[0].mxu0 %v642
      %v755 = vpop.f32.mrb[0].mxu0
      %v756 = vadd.f32 %v671, %v755
      %v757 = vpop.f32.mrb[0].mxu0
      %v758 = vpop.f32.mrb[0].mxu0
      %v759 = vadd.f32 %v671, %v758
      %v760 = vpop.f32.mrb[0].mxu0
      %761 = vmatprep.mubr.bf16.mxu0 0
      %762 = vmatmul.mubr.bf16.gmra.mrb[0].mxu0 %v643
      %v763 = vpop.f32.mrb[0].mxu0
      %v764 = vadd.f32 %v671, %v763
      %v765 = vpop.f32.mrb[0].mxu0
      %v766 = vpop.f32.mrb[0].mxu0
      %v767 = vadd.f32 %v671, %v766
      %v768 = vpop.f32.mrb[0].mxu0
      %769 = vmatprep.mubr.bf16.mxu0 0
      %770 = vmatmul.mubr.bf16.gmra.mrb[0].mxu0 %v644
      %v771 = vpop.f32.mrb[0].mxu0
      %v772 = vadd.f32 %v671, %v771
      %v773 = vpop.f32.mrb[0].mxu0
      %v774 = vpop.f32.mrb[0].mxu0
      %v775 = vadd.f32 %v671, %v774
      %v776 = vpop.f32.mrb[0].mxu0
      %777 = vmatprep.mubr.bf16.mxu0 0
      %778 = vmatmul.mubr.bf16.gmra.mrb[0].mxu0 %v645
      %v779 = vpop.f32.mrb[0].mxu0
      %v780 = vadd.f32 %v671, %v779
      %v781 = vpop.f32.mrb[0].mxu0
      %v782 = vpop.f32.mrb[0].mxu0
      %v783 = vadd.f32 %v671, %v782
      %v784 = vpop.f32.mrb[0].mxu0
      %785 = vmatprep.mubr.bf16.mxu0 0
      %786 = vmatmul.mubr.bf16.gmra.mrb[0].mxu0 %v646
      %v787 = vpop.f32.mrb[0].mxu0
      %v788 = vadd.f32 %v671, %v787
      %v789 = vpop.f32.mrb[0].mxu0
      %v790 = vpop.f32.mrb[0].mxu0
      %v791 = vadd.f32 %v671, %v790
      %v792 = vpop.f32.mrb[0].mxu0
      %793 = vmatprep.mubr.bf16.mxu0 0
      %794 = vmatmul.mubr.bf16.gmra.mrb[0].mxu0 %v647
      %v795 = vpop.f32.mrb[0].mxu0
      %v796 = vadd.f32 %v671, %v795
      %v797 = vpop.f32.mrb[0].mxu0
      %v798 = vpop.f32.mrb[0].mxu0
      %v799 = vadd.f32 %v671, %v798
      %v800 = vpop.f32.mrb[0].mxu0
      %801 = vmatprep.mubr.bf16.mxu0 0
      %802 = vmatmul.mubr.bf16.gmra.mrb[0].mxu0 %v648
      %v803 = vpop.f32.mrb[0].mxu0
      %v804 = vadd.f32 %v671, %v803
      %v805 = vpop.f32.mrb[0].mxu0
      %v806 = vpop.f32.mrb[0].mxu0
      %v807 = vadd.f32 %v671, %v806
      %v808 = vpop.f32.mrb[0].mxu0
      %809 = vmatprep.mubr.bf16.mxu0 0
      %810 = vmatmul.mubr.bf16.gmra.mrb[0].mxu0 %v649
      %v811 = vpop.f32.mrb[0].mxu0
      %v812 = vadd.f32 %v671, %v811
      %v813 = vpop.f32.mrb[0].mxu0
      %v814 = vpop.f32.mrb[0].mxu0
      %v815 = vadd.f32 %v671, %v814
      %v816 = vpop.f32.mrb[0].mxu0
      %817 = vdwg.mxu0
      %v818 = vmax.f32 %v756, 0.0
      %v819 = vmax.f32 %v759, 0.0
      %v820 = vmax.f32 %v764, 0.0
      %v821 = vmax.f32 %v767, 0.0
      %v822 = vmax.f32 %v772, 0.0
      %v823 = vmax.f32 %v775, 0.0
      %v824 = vmax.f32 %v780, 0.0
      %v825 = vmax.f32 %v783, 0.0
      %v826 = vmax.f32 %v788, 0.0
      %v827 = vmax.f32 %v791, 0.0
      %v828 = vmax.f32 %v796, 0.0
      %v829 = vmax.f32 %v799, 0.0
      %v830 = vmax.f32 %v804, 0.0
      %v831 = vmax.f32 %v807, 0.0
      %v832 = vmax.f32 %v812, 0.0
      %v833 = vmax.f32 %v815, 0.0
      %v834 = vpack.c.bf16 %v819, %v818
      %v835 = vpack.c.bf16 %v821, %v820
      %v836 = vpack.c.bf16 %v823, %v822
      %v837 = vpack.c.bf16 %v825, %v824
      %v838 = vpack.c.bf16 %v827, %v826
      %v839 = vpack.c.bf16 %v829, %v828
      %v840 = vpack.c.bf16 %v831, %v830
      %v841 = vpack.c.bf16 %v833, %v832
      %v850 = vunpack.c.l.b16 %v834
      %v851 = vunpack.c.h.b16 %v834
      %v852 = vunpack.c.l.b16 %v835
      %v853 = vunpack.c.h.b16 %v835
      %v854 = vunpack.c.l.b16 %v836
      %v855 = vunpack.c.h.b16 %v836
      %v856 = vunpack.c.l.b16 %v837
      %v857 = vunpack.c.h.b16 %v837
      %v858 = vunpack.c.l.b16 %v838
      %v859 = vunpack.c.h.b16 %v838
      %v860 = vunpack.c.l.b16 %v839
      %v861 = vunpack.c.h.b16 %v839
      %v862 = vunpack.c.l.b16 %v840
      %v863 = vunpack.c.h.b16 %v840
      %v864 = vunpack.c.l.b16 %v841
      %v865 = vunpack.c.h.b16 %v841
      %v866 = vpack.c.b16 %v850, %v850
      %v867 = vpack.c.b16 %v851, %v851
      %v868 = vpack.c.b16 %v852, %v852
      %v869 = vpack.c.b16 %v853, %v853
      %v870 = vpack.c.b16 %v854, %v854
      %v871 = vpack.c.b16 %v855, %v855
      %v872 = vpack.c.b16 %v856, %v856
      %v873 = vpack.c.b16 %v857, %v857
      %v874 = vpack.c.b16 %v858, %v858
      %v875 = vpack.c.b16 %v859, %v859
      %v876 = vpack.c.b16 %v860, %v860
      %v877 = vpack.c.b16 %v861, %v861
      %v878 = vpack.c.b16 %v862, %v862
      %v879 = vpack.c.b16 %v863, %v863
      %v880 = vpack.c.b16 %v864, %v864
      %v881 = vpack.c.b16 %v865, %v865
      %898 = vst [vmem:[#allocation11] sm:$0xf] %v866
      %899 = vst [vmem:[#allocation11 + $0x4] sm:$0xf] %v867
      %900 = vst [vmem:[#allocation11 + $0x8] sm:$0xf] %v868
      %901 = vst [vmem:[#allocation11 + $0xc] sm:$0xf] %v869
      %902 = vst [vmem:[#allocation11 + $0x10] sm:$0xf] %v870
      %903 = vst [vmem:[#allocation11 + $0x14] sm:$0xf] %v871
      %904 = vst [vmem:[#allocation11 + $0x18] sm:$0xf] %v872
      %905 = vst [vmem:[#allocation11 + $0x1c] sm:$0xf] %v873
      %906 = vst [vmem:[#allocation11 + $0x20] sm:$0xf] %v874
      %907 = vst [vmem:[#allocation11 + $0x24] sm:$0xf] %v875
      %908 = vst [vmem:[#allocation11 + $0x28] sm:$0xf] %v876
      %909 = vst [vmem:[#allocation11 + $0x2c] sm:$0xf] %v877
      %910 = vst [vmem:[#allocation11 + $0x30] sm:$0xf] %v878
      %911 = vst [vmem:[#allocation11 + $0x34] sm:$0xf] %v879
      %912 = vst [vmem:[#allocation11 + $0x38] sm:$0xf] %v880
      %913 = vst [vmem:[#allocation11 + $0x3c] sm:$0xf] %v881
    $region49: #{tpu_custom_call.1} parent=1 // pred_fallthru
      _
    // Predicated region
    $region50: #{tpu_custom_call.1} parent=1 // pred_check
      _
    $region51: #{tpu_custom_call.1} parent=1 // pred_check_branch
      %915 = sbr.rel (0) target = $region53
    $region52: #{tpu_custom_call.1} parent=1 // pred_region
      %s917 = ssub.s32 1024, 1024
      %918 = vsyncadd [#allocation5], %s917
      %s919 = sshll.u32 [#allocation11], 4
      %s920 = int_to_ptr.vmem [resolvable:$true] %s919
      %925 = dma.vmem_to_hbm [thread:$0]  %s920, 1024, %s6, [#allocation5], 64, 64, 4
    $region53: #{tpu_custom_call.1} parent=1 // pred_fallthru
      _
    // Predicated region
    $region54: #{tpu_custom_call.1} parent=1 // pred_check
      _
    $region55: #{tpu_custom_call.1} parent=1 // pred_check_branch
      %927 = sbr.rel (0) target = $region57
    $region56: #{tpu_custom_call.1} parent=1 // pred_region
      %928 = dma.done [#allocation5], 1024
    $region57: #{tpu_custom_call.1} parent=1 // pred_fallthru
      _
    %929 = vsyncpa [#allocation4], 1
    %930 = vsyncpa [#allocation7], 1
    %931 = vsyncpa [#allocation10], 1
    %932 = vsyncpa [#allocation5], 1

</llo_original>
